<compile_context>
chip_gen: v7x
topology: tpu7x:2x2x1
jax: 0.10.0
libtpu: 0.0.40
codegen_flags: <defaults>
</compile_context>

<pallas_src>
import jax
import jax.numpy as jnp
from jax.experimental import pallas as pl
from jax.experimental.pallas import tpu as pltpu


def _conv1x1_bn_kernel(x_ref, w_ref, scale_ref, shift_ref, o_ref):
    # x_ref:     (TM, Cin)   stride-2 pixels, channel-last (compute dtype)
    # w_ref:     (Cin, TN)   raw conv weight (compute dtype)
    # scale_ref: (1, TN)     f32 BN scale  = gamma / sqrt(var + eps)
    # shift_ref: (1, TN)     f32 BN shift  = beta - mean * scale
    # o_ref:     (TM, TN)
    acc = jnp.dot(x_ref[...], w_ref[...], preferred_element_type=jnp.float32)
    o_ref[...] = (acc * scale_ref[...] + shift_ref[...]).astype(o_ref.dtype)


def _round_up(v, m):
    return ((v + m - 1) // m) * m


def _resident_spec(block_shape, index_map):
    # Grid-invariant operands (weight / BN scale+shift on the 1-D M grid):
    # a single VMEM buffer is enough -- they are DMA'd once and never revolve.
    # Fall back to the default (double-buffered) spec if this jax build does
    # not expose pipeline_mode / Buffered.
    try:
        return pl.BlockSpec(block_shape, index_map, pipeline_mode=pl.Buffered(1))
    except (AttributeError, TypeError):
        return pl.BlockSpec(block_shape, index_map)


def downsample_forward(x, weight, gamma, beta, running_mean, running_var,
                       eps=1e-5, *, compute_dtype=None, out_dtype=None,
                       data_format="NCHW", tile_m=1024, tile_n=512,
                       max_resident_weight_bytes=16 << 20):
    """Downsample = Conv2d(Cin, Cout, 1, stride=2, bias=False) + BatchNorm2d(eval).

    data_format:   "NCHW" (PyTorch layout, default) or "NHWC" (TPU-friendly:
                   both layout transposes are skipped, output is NHWC).
    compute_dtype: MXU input dtype (pass jnp.bfloat16 in production); the
                   accumulation and BN affine epilogue are always f32.
    out_dtype:     store dtype of the output (defaults to x.dtype; pass
                   jnp.bfloat16 to halve the dominant output HBM stream).
    """
    if data_format == "NCHW":
        N, Cin, H, W = x.shape
    elif data_format == "NHWC":
        N, H, W, Cin = x.shape
    else:
        raise ValueError(f"unknown data_format {data_format!r}")
    Cout = weight.shape[0]

    # ---- stride-2 pixel selection -> channel-last activation matrix --------
    if data_format == "NCHW":
        xs = x[:, :, ::2, ::2]                                # (N, Cin, Ho, Wo)
        Ho, Wo = xs.shape[2], xs.shape[3]
        xm = jnp.transpose(xs, (0, 2, 3, 1)).reshape(N * Ho * Wo, Cin)
    else:
        xs = x[:, ::2, ::2, :]                                # (N, Ho, Wo, Cin)
        Ho, Wo = xs.shape[1], xs.shape[2]
        xm = xs.reshape(N * Ho * Wo, Cin)
    M = N * Ho * Wo

    # ---- BatchNorm (inference) as f32 per-channel scale & shift ------------
    inv_std = jax.lax.rsqrt(running_var.astype(jnp.float32) + eps)
    scale = (gamma.astype(jnp.float32) * inv_std).reshape(1, Cout)      # f32
    shift = (beta.astype(jnp.float32)
             - running_mean.astype(jnp.float32) * scale[0]).reshape(1, Cout)

    cdt = jnp.dtype(x.dtype if compute_dtype is None else compute_dtype)
    odt = jnp.dtype(x.dtype if out_dtype is None else out_dtype)
    xm = xm.astype(cdt)
    wm = jnp.transpose(weight.reshape(Cout, Cin)).astype(cdt)     # (Cin, Cout)
    cdt_size = cdt.itemsize
    odt_size = odt.itemsize

    # ---- tiling -------------------------------------------------------------
    # TM: as large as possible (amortizes ~0.35us/step), multiple of 16 so bf16
    # (16,128) sublane packing stays unmasked; full M when it already fits.
    tm = M if M <= tile_m else max(16, (tile_m // 16) * 16)

    w_bytes = _round_up(Cin, 16) * _round_up(Cout, 128) * cdt_size
    weight_resident = w_bytes <= max_resident_weight_bytes

    if weight_resident:
        # Primary path: 1-D grid over M; weight / scale / shift are resident,
        # DMA'd once. Output tile is lane-dense over the full Cout.
        tn = Cout
        grid = (pl.cdiv(M, tm),)
        x_spec = pl.BlockSpec((tm, Cin), lambda i: (i, 0))
        w_spec = _resident_spec((Cin, tn), lambda i: (0, 0))
        s_spec = _resident_spec((1, tn), lambda i: (0, 0))
        o_spec = pl.BlockSpec((tm, tn), lambda i: (i, 0))
        dim_sem = ("parallel",)
        w_reads = 1
    else:
        # Fallback: weight too large to keep resident -> 2-D (M, Cout) grid.
        # 256-aligned N tiles fill v6e/v7x's 256x256 MXU and keep stores
        # unmasked; both axes parallel for megacore.
        tn = Cout if Cout <= tile_n else max(256, (tile_n // 256) * 256)
        grid = (pl.cdiv(M, tm), pl.cdiv(Cout, tn))
        x_spec = pl.BlockSpec((tm, Cin), lambda i, j: (i, 0))
        w_spec = pl.BlockSpec((Cin, tn), lambda i, j: (0, j))
        s_spec = pl.BlockSpec((1, tn), lambda i, j: (0, j))
        o_spec = pl.BlockSpec((tm, tn), lambda i, j: (i, j))
        dim_sem = ("parallel", "parallel")
        w_reads = pl.cdiv(M, tm)

    # ---- explicit VMEM budget (v7x: 64 MiB physical; v5e: 16 MiB scoped) ---
    n_wbuf = 1 if weight_resident else 2
    vmem_needed = (2 * _round_up(tm, 16) * _round_up(Cin, 128) * cdt_size      # x (dbl)
                   + n_wbuf * _round_up(Cin, 16) * _round_up(tn, 128) * cdt_size  # w
                   + n_wbuf * 2 * 8 * _round_up(tn, 128) * 4                   # scale+shift
                   + 2 * _round_up(tm, 8) * _round_up(tn, 128) * odt_size)     # out (dbl)
    vmem_limit = int(min(max(vmem_needed + (4 << 20), 32 << 20), 64 << 20))

    cost = pl.CostEstimate(
        flops=2 * M * Cin * Cout,
        transcendentals=0,
        bytes_accessed=(xm.size * cdt_size
                        + w_reads * wm.size * cdt_size
                        + 2 * Cout * 4
                        + M * Cout * odt_size))

    out = pl.pallas_call(
        _conv1x1_bn_kernel,
        out_shape=jax.ShapeDtypeStruct((M, Cout), odt),
        grid_spec=pltpu.PrefetchScalarGridSpec(
            num_scalar_prefetch=0,
            grid=grid,
            in_specs=[x_spec, w_spec, s_spec, s_spec],
            out_specs=o_spec,
        ),
        compiler_params=pltpu.CompilerParams(
            dimension_semantics=dim_sem,
            vmem_limit_bytes=vmem_limit),
        cost_estimate=cost,
    )(xm, wm, scale, shift)

    if data_format == "NCHW":
        # TODO(synk): drop this transpose when the downstream consumer is NHWC.
        return jnp.transpose(out.reshape(N, Ho, Wo, Cout), (0, 3, 1, 2))
    return out.reshape(N, Ho, Wo, Cout)


def _reference(x_nchw, weight, gamma, beta, running_mean, running_var, eps=1e-5):
    xs = x_nchw[:, :, ::2, ::2]
    w = weight.reshape(weight.shape[0], weight.shape[1])
    conv = jnp.einsum('nchw,oc->nohw', xs, w)
    inv_std = 1.0 / jnp.sqrt(running_var + eps)
    scale = (gamma * inv_std)[None, :, None, None]
    shift = (beta - running_mean * gamma * inv_std)[None, :, None, None]
    return conv * scale + shift


if __name__ == "__main__":
    key = jax.random.PRNGKey(0)
    k_x, k_w, k_g, k_b, k_m, k_v = jax.random.split(key, 6)

    N, Cin, H, W = 2, 4, 16, 16
    Cout = 8

    x = jax.random.normal(k_x, (N, Cin, H, W), dtype=jnp.float32)
    weight = jax.random.normal(k_w, (Cout, Cin, 1, 1), dtype=jnp.float32) * 0.1
    gamma = jax.random.normal(k_g, (Cout,), dtype=jnp.float32) * 0.1 + 1.0
    beta = jax.random.normal(k_b, (Cout,), dtype=jnp.float32) * 0.1
    running_mean = jax.random.normal(k_m, (Cout,), dtype=jnp.float32) * 0.1
    running_var = jax.random.uniform(k_v, (Cout,), jnp.float32, 0.5, 1.5)

    ref = _reference(x, weight, gamma, beta, running_mean, running_var)

    # 1) Default path: f32 compute/out, NCHW, 1-D resident-weight grid.
    out = downsample_forward(x, weight, gamma, beta, running_mean, running_var)
    out = jax.block_until_ready(out)
    assert out.shape == (N, Cout, H // 2, W // 2), out.shape
    assert jnp.allclose(out, ref, atol=1e-5, rtol=1e-5), \
        float(jnp.max(jnp.abs(out - ref)))

    # 2) Multi-step 1-D M grid (pipelined x/out streams, resident weight).
    out_t = downsample_forward(x, weight, gamma, beta, running_mean, running_var,
                               tile_m=32)
    out_t = jax.block_until_ready(out_t)
    assert jnp.allclose(out_t, ref, atol=1e-5, rtol=1e-5), \
        float(jnp.max(jnp.abs(out_t - ref)))

    # 3) 2-D fallback grid (weight forced non-resident).
    out_f = downsample_forward(x, weight, gamma, beta, running_mean, running_var,
                               tile_m=32, max_resident_weight_bytes=0)
    out_f = jax.block_until_ready(out_f)
    assert jnp.allclose(out_f, ref, atol=1e-5, rtol=1e-5), \
        float(jnp.max(jnp.abs(out_f - ref)))

    # 4) NHWC fast path: no layout transposes on either side of the kernel.
    x_nhwc = jnp.transpose(x, (0, 2, 3, 1))
    out_nhwc = downsample_forward(x_nhwc, weight, gamma, beta, running_mean,
                                  running_var, data_format="NHWC")
    out_nhwc = jax.block_until_ready(out_nhwc)
    assert out_nhwc.shape == (N, H // 2, W // 2, Cout), out_nhwc.shape
    ref_nhwc = jnp.transpose(ref, (0, 2, 3, 1))
    assert jnp.allclose(out_nhwc, ref_nhwc, atol=1e-5, rtol=1e-5), \
        float(jnp.max(jnp.abs(out_nhwc - ref_nhwc)))

    # 5) Production setting: bf16 MXU inputs + bf16 output, f32 acc/epilogue.
    out_bf = downsample_forward(x, weight, gamma, beta, running_mean, running_var,
                                compute_dtype=jnp.bfloat16,
                                out_dtype=jnp.bfloat16)
    out_bf = jax.block_until_ready(out_bf)
    assert out_bf.dtype == jnp.bfloat16
    assert jnp.allclose(out_bf.astype(jnp.float32), ref, atol=5e-2, rtol=5e-2), \
        float(jnp.max(jnp.abs(out_bf.astype(jnp.float32) - ref)))

    print("KERNEL_OK")
</pallas_src>

<mosaic_0001>
module attributes {stable_mosaic.version = 11 : i64} {
  func.func @_conv1x1_bn_kernel(%arg0: i32, %arg1: memref<128x4xf32, #tpu.memory_space<vmem>>, %arg2: memref<4x8xf32, #tpu.memory_space<vmem>>, %arg3: memref<1x8xf32, #tpu.memory_space<vmem>>, %arg4: memref<1x8xf32, #tpu.memory_space<vmem>>, %arg5: memref<128x8xf32, #tpu.memory_space<vmem>>) attributes {dimension_semantics = [#tpu.dimension_semantics<parallel>], iteration_bounds = array<i64: 1>, scalar_prefetch = 0 : i64, scratch_operands = 0 : i64, tpu.core_type = #tpu.core_type<tc>, window_params = [{transform_indices = @transform_0, window_bounds = array<i64: 128, 4>}, {pipeline_mode = #tpu.pipeline_mode<synchronous>, transform_indices = @transform_1, window_bounds = array<i64: 4, 8>}, {pipeline_mode = #tpu.pipeline_mode<synchronous>, transform_indices = @transform_2, window_bounds = array<i64: 1, 8>}, {pipeline_mode = #tpu.pipeline_mode<synchronous>, transform_indices = @transform_3, window_bounds = array<i64: 1, 8>}, {transform_indices = @transform_4, window_bounds = array<i64: 128, 8>}]} {
    %c0 = arith.constant 0 : index
    %c0_0 = arith.constant 0 : index
    %0 = vector.load %arg1[%c0, %c0_0] : memref<128x4xf32, #tpu.memory_space<vmem>>, vector<128x4xf32>
    %c0_1 = arith.constant 0 : index
    %c0_2 = arith.constant 0 : index
    %1 = vector.load %arg2[%c0_1, %c0_2] : memref<4x8xf32, #tpu.memory_space<vmem>>, vector<4x8xf32>
    %cst = arith.constant dense<0.000000e+00> : vector<128x8xf32>
    %2 = tpu.matmul %0, %1, %cst {dimension_numbers = #tpu.dot_dimension_numbers<[1], [0], [0], [1], [0, 0, 1, 1], [], []>} : vector<128x4xf32>, vector<4x8xf32>, vector<128x8xf32> -> vector<128x8xf32>
    %c0_3 = arith.constant 0 : index
    %c0_4 = arith.constant 0 : index
    %3 = vector.load %arg3[%c0_3, %c0_4] : memref<1x8xf32, #tpu.memory_space<vmem>>, vector<1x8xf32>
    %4 = vector.broadcast %3 : vector<1x8xf32> to vector<128x8xf32>
    %5 = arith.mulf %2, %4 : vector<128x8xf32>
    %c0_5 = arith.constant 0 : index
    %c0_6 = arith.constant 0 : index
    %6 = vector.load %arg4[%c0_5, %c0_6] : memref<1x8xf32, #tpu.memory_space<vmem>>, vector<1x8xf32>
    %7 = vector.broadcast %6 : vector<1x8xf32> to vector<128x8xf32>
    %8 = arith.addf %5, %7 : vector<128x8xf32>
    %c0_7 = arith.constant 0 : index
    %c0_8 = arith.constant 0 : index
    %9 = vector.load %arg5[%c0_7, %c0_8] : memref<128x8xf32, #tpu.memory_space<vmem>>, vector<128x8xf32>
    tpu.vector_store %arg5[%c0_7, %c0_8], %8 {strides = array<i32>} : memref<128x8xf32, #tpu.memory_space<vmem>>, vector<128x8xf32>,
    return
  }
  func.func @transform_0(%arg0: i32) -> (i32, i32) {
    %c0_i32 = arith.constant 0 : i32
    %c0_i32_0 = arith.constant 0 : i32
    return %arg0, %c0_i32 : i32, i32
  }
  func.func @transform_1(%arg0: i32) -> (i32, i32) {
    %c0_i32 = arith.constant 0 : i32
    %c0_i32_0 = arith.constant 0 : i32
    %c0_i32_1 = arith.constant 0 : i32
    return %c0_i32, %c0_i32_0 : i32, i32
  }
  func.func @transform_2(%arg0: i32) -> (i32, i32) {
    %c0_i32 = arith.constant 0 : i32
    %c0_i32_0 = arith.constant 0 : i32
    %c0_i32_1 = arith.constant 0 : i32
    return %c0_i32, %c0_i32_0 : i32, i32
  }
  func.func @transform_3(%arg0: i32) -> (i32, i32) {
    %c0_i32 = arith.constant 0 : i32
    %c0_i32_0 = arith.constant 0 : i32
    %c0_i32_1 = arith.constant 0 : i32
    return %c0_i32, %c0_i32_0 : i32, i32
  }
  func.func @transform_4(%arg0: i32) -> (i32, i32) {
    %c0_i32 = arith.constant 0 : i32
    %c0_i32_0 = arith.constant 0 : i32
    return %arg0, %c0_i32 : i32, i32
  }
}

</mosaic_0001>

<llo_original>
// kernel: tpu_custom_call.1
$region0: #{tpu_custom_call.1}
  #allocation0 [shape = 'u32[]', space=smem, size = 0x4, offset = 0x4, fixed_abs, tag = 'smem constant byte address 0x4 - core index']
  #allocation1 [shape = 'u32[144,128]{1,0:T(1,128)}', space=vmem, size = 0x12000, scoped, tag = 'internal scratch']
  %s0 = inlined_call_operand.vmem [shape: f32[128,4], index: 0, kind: input, shape index: {}]
  %s1 = inlined_call_operand.vmem [shape: f32[4,8], index: 1, kind: input, shape index: {}]
  %s2 = inlined_call_operand.vmem [shape: f32[1,8], index: 2, kind: input, shape index: {}]
  %s3 = inlined_call_operand.vmem [shape: f32[1,8], index: 3, kind: input, shape index: {}]
  %s4 = inlined_call_operand.vmem [shape: f32[128,8], index: 4, kind: output, shape index: {}]
  %s5 = sld [smem:[#allocation0]]
  $region26: #{tpu_custom_call.1} parent=0
    _
  %s7 = ssub.s32 1, %s5
  %s8 = scalar_select 0, %s7, %s5
  // Predicated region
  $region2: #{tpu_custom_call.1} parent=0 // pred_check
    _
  $region3: #{tpu_custom_call.1} parent=0 // pred_check_branch
    %10 = sbr.rel (0) target = $region5
  $region4: #{tpu_custom_call.1} parent=0 // pred_region
    _
  $region5: #{tpu_custom_call.1} parent=0 // pred_fallthru
    _
  // Predicated region
  $region6: #{tpu_custom_call.1} parent=0 // pred_check
    _
  $region7: #{tpu_custom_call.1} parent=0 // pred_check_branch
    %12 = sbr.rel (0) target = $region9
  $region8: #{tpu_custom_call.1} parent=0 // pred_region
    _
  $region9: #{tpu_custom_call.1} parent=0 // pred_fallthru
    _
  // Predicated region
  $region10: #{tpu_custom_call.1} parent=0 // pred_check
    _
  $region11: #{tpu_custom_call.1} parent=0 // pred_check_branch
    %14 = sbr.rel (0) target = $region13
  $region12: #{tpu_custom_call.1} parent=0 // pred_region
    _
  $region13: #{tpu_custom_call.1} parent=0 // pred_fallthru
    _
  // Predicated region
  $region14: #{tpu_custom_call.1} parent=0 // pred_check
    _
  $region15: #{tpu_custom_call.1} parent=0 // pred_check_branch
    %16 = sbr.rel (0) target = $region17
  $region16: #{tpu_custom_call.1} parent=0 // pred_region
    _
  $region17: #{tpu_custom_call.1} parent=0 // pred_fallthru
    _
  %v17 = vld [vmem:[%s0] sm:$0xff]
  %v18 = vld [vmem:[%s0 + $0x8] sm:$0xff]
  %v19 = vld [vmem:[%s0 + $0x10] sm:$0xff]
  %v20 = vld [vmem:[%s0 + $0x18] sm:$0xff]
  %v21 = vld [vmem:[%s0 + $0x20] sm:$0xff]
  %v22 = vld [vmem:[%s0 + $0x28] sm:$0xff]
  %v23 = vld [vmem:[%s0 + $0x30] sm:$0xff]
  %v24 = vld [vmem:[%s0 + $0x38] sm:$0xff]
  %v25 = vld [vmem:[%s0 + $0x40] sm:$0xff]
  %v26 = vld [vmem:[%s0 + $0x48] sm:$0xff]
  %v27 = vld [vmem:[%s0 + $0x50] sm:$0xff]
  %v28 = vld [vmem:[%s0 + $0x58] sm:$0xff]
  %v29 = vld [vmem:[%s0 + $0x60] sm:$0xff]
  %v30 = vld [vmem:[%s0 + $0x68] sm:$0xff]
  %v31 = vld [vmem:[%s0 + $0x70] sm:$0xff]
  %v32 = vld [vmem:[%s0 + $0x78] sm:$0xff]
  %v33 = vld [vmem:[%s1] sm:$0xf]
  %vm34 = vcmask 31744
  %v36 = vsel %vm34, %v17, 0
  %v39 = vsel %vm34, %v18, 0
  %v42 = vsel %vm34, %v19, 0
  %v45 = vsel %vm34, %v20, 0
  %v48 = vsel %vm34, %v21, 0
  %v51 = vsel %vm34, %v22, 0
  %v54 = vsel %vm34, %v23, 0
  %v57 = vsel %vm34, %v24, 0
  %v60 = vsel %vm34, %v25, 0
  %v63 = vsel %vm34, %v26, 0
  %v66 = vsel %vm34, %v27, 0
  %v69 = vsel %vm34, %v28, 0
  %v72 = vsel %vm34, %v29, 0
  %v75 = vsel %vm34, %v30, 0
  %v78 = vsel %vm34, %v31, 0
  %v81 = vsel %vm34, %v32, 0
  %vm83 = vcmask 1043456
  %v85 = vsel %vm83, %v33, 0
  %87 = vmatprep.subr.mxu0 0.0
  %88 = vmatpush1.msra.mxu0 %v85
  %89 = vmatprep.subr.mxu0 0.0
  %90 = vmatpush1.msra.mxu0 0.0
  %91 = vmatprep.subr.mxu0 0.0
  %92 = vmatpush1.msra.mxu0 0.0
  %93 = vmatprep.subr.mxu0 0.0
  %94 = vmatpush1.msra.mxu0 0.0
  %95 = vmatprep.subr.mxu0 0.0
  %96 = vmatpush1.msra.mxu0 0.0
  %97 = vmatprep.subr.mxu0 0.0
  %98 = vmatpush1.msra.mxu0 0.0
  %99 = vmatprep.subr.mxu0 0.0
  %100 = vmatpush1.msra.mxu0 0.0
  %101 = vmatprep.subr.mxu0 0.0
  %102 = vmatpush1.msra.mxu0 0.0
  %103 = vmatprep.subr.mxu0 0.0
  %104 = vmatpush1.msra.mxu0 0.0
  %105 = vmatprep.subr.mxu0 0.0
  %106 = vmatpush1.msra.mxu0 0.0
  %107 = vmatprep.subr.mxu0 0.0
  %108 = vmatpush1.msra.mxu0 0.0
  %109 = vmatprep.subr.mxu0 0.0
  %110 = vmatpush1.msra.mxu0 0.0
  %111 = vmatprep.subr.mxu0 0.0
  %112 = vmatpush1.msra.mxu0 0.0
  %113 = vmatprep.subr.mxu0 0.0
  %114 = vmatpush1.msra.mxu0 0.0
  %115 = vmatprep.subr.mxu0 0.0
  %116 = vmatpush1.msra.mxu0 0.0
  %117 = vmatprep.subr.mxu0 0.0
  %118 = vmatpush1.msra.mxu0 0.0
  %119 = vmatprep.subr.mxu0 0.0
  %120 = vmatpush1.msra.mxu0 0.0
  %121 = vmatprep.subr.mxu0 0.0
  %122 = vmatpush1.msra.mxu0 0.0
  %123 = vmatprep.subr.mxu0 0.0
  %124 = vmatpush1.msra.mxu0 0.0
  %125 = vmatprep.subr.mxu0 0.0
  %126 = vmatpush1.msra.mxu0 0.0
  %127 = vmatprep.subr.mxu0 0.0
  %128 = vmatpush1.msra.mxu0 0.0
  %129 = vmatprep.subr.mxu0 0.0
  %130 = vmatpush1.msra.mxu0 0.0
  %131 = vmatprep.subr.mxu0 0.0
  %132 = vmatpush1.msra.mxu0 0.0
  %133 = vmatprep.subr.mxu0 0.0
  %134 = vmatpush1.msra.mxu0 0.0
  %135 = vmatprep.subr.mxu0 0.0
  %136 = vmatpush1.msra.mxu0 0.0
  %137 = vmatprep.subr.mxu0 0.0
  %138 = vmatpush1.msra.mxu0 0.0
  %139 = vmatprep.subr.mxu0 0.0
  %140 = vmatpush1.msra.mxu0 0.0
  %141 = vmatprep.subr.mxu0 0.0
  %142 = vmatpush1.msra.mxu0 0.0
  %143 = vmatprep.subr.mxu0 0.0
  %144 = vmatpush1.msra.mxu0 0.0
  %145 = vmatprep.subr.mxu0 0.0
  %146 = vmatpush1.msra.mxu0 0.0
  %147 = vmatprep.subr.mxu0 0.0
  %148 = vmatpush1.msra.mxu0 0.0
  %149 = vmatprep.subr.mxu0 0.0
  %150 = vmatpush1.msra.mxu0 0.0
  %151 = vmatprep.mubr.f32.mxu0 0.0
  %152 = vmatmul.mubr.f32.gmra.mrb[0].mxu0 %v36
  %v153 = vpop.f32.mrb[0].mxu0
  %v154 = vadd.f32 0.0, %v153
  %v155 = vpop.f32.mrb[0].mxu0
  %156 = vmatprep.mubr.f32.mxu0 0.0
  %157 = vmatmul.mubr.f32.gmra.mrb[0].mxu0 %v39
  %v158 = vpop.f32.mrb[0].mxu0
  %v159 = vadd.f32 0.0, %v158
  %v160 = vpop.f32.mrb[0].mxu0
  %161 = vmatprep.mubr.f32.mxu0 0.0
  %162 = vmatmul.mubr.f32.gmra.mrb[0].mxu0 %v42
  %v163 = vpop.f32.mrb[0].mxu0
  %v164 = vadd.f32 0.0, %v163
  %v165 = vpop.f32.mrb[0].mxu0
  %166 = vmatprep.mubr.f32.mxu0 0.0
  %167 = vmatmul.mubr.f32.gmra.mrb[0].mxu0 %v45
  %v168 = vpop.f32.mrb[0].mxu0
  %v169 = vadd.f32 0.0, %v168
  %v170 = vpop.f32.mrb[0].mxu0
  %171 = vmatprep.mubr.f32.mxu0 0.0
  %172 = vmatmul.mubr.f32.gmra.mrb[0].mxu0 %v48
  %v173 = vpop.f32.mrb[0].mxu0
  %v174 = vadd.f32 0.0, %v173
  %v175 = vpop.f32.mrb[0].mxu0
  %176 = vmatprep.mubr.f32.mxu0 0.0
  %177 = vmatmul.mubr.f32.gmra.mrb[0].mxu0 %v51
  %v178 = vpop.f32.mrb[0].mxu0
  %v179 = vadd.f32 0.0, %v178
  %v180 = vpop.f32.mrb[0].mxu0
  %181 = vmatprep.mubr.f32.mxu0 0.0
  %182 = vmatmul.mubr.f32.gmra.mrb[0].mxu0 %v54
  %v183 = vpop.f32.mrb[0].mxu0
  %v184 = vadd.f32 0.0, %v183
  %v185 = vpop.f32.mrb[0].mxu0
  %186 = vmatprep.mubr.f32.mxu0 0.0
  %187 = vmatmul.mubr.f32.gmra.mrb[0].mxu0 %v57
  %v188 = vpop.f32.mrb[0].mxu0
  %v189 = vadd.f32 0.0, %v188
  %v190 = vpop.f32.mrb[0].mxu0
  %191 = vmatprep.mubr.f32.mxu0 0.0
  %192 = vmatmul.mubr.f32.gmra.mrb[0].mxu0 %v60
  %v193 = vpop.f32.mrb[0].mxu0
  %v194 = vadd.f32 0.0, %v193
  %v195 = vpop.f32.mrb[0].mxu0
  %196 = vmatprep.mubr.f32.mxu0 0.0
  %197 = vmatmul.mubr.f32.gmra.mrb[0].mxu0 %v63
  %v198 = vpop.f32.mrb[0].mxu0
  %v199 = vadd.f32 0.0, %v198
  %v200 = vpop.f32.mrb[0].mxu0
  %201 = vmatprep.mubr.f32.mxu0 0.0
  %202 = vmatmul.mubr.f32.gmra.mrb[0].mxu0 %v66
  %v203 = vpop.f32.mrb[0].mxu0
  %v204 = vadd.f32 0.0, %v203
  %v205 = vpop.f32.mrb[0].mxu0
  %206 = vmatprep.mubr.f32.mxu0 0.0
  %207 = vmatmul.mubr.f32.gmra.mrb[0].mxu0 %v69
  %v208 = vpop.f32.mrb[0].mxu0
  %v209 = vadd.f32 0.0, %v208
  %v210 = vpop.f32.mrb[0].mxu0
  %211 = vmatprep.mubr.f32.mxu0 0.0
  %212 = vmatmul.mubr.f32.gmra.mrb[0].mxu0 %v72
  %v213 = vpop.f32.mrb[0].mxu0
  %v214 = vadd.f32 0.0, %v213
  %v215 = vpop.f32.mrb[0].mxu0
  %216 = vmatprep.mubr.f32.mxu0 0.0
  %217 = vmatmul.mubr.f32.gmra.mrb[0].mxu0 %v75
  %v218 = vpop.f32.mrb[0].mxu0
  %v219 = vadd.f32 0.0, %v218
  %v220 = vpop.f32.mrb[0].mxu0
  %221 = vmatprep.mubr.f32.mxu0 0.0
  %222 = vmatmul.mubr.f32.gmra.mrb[0].mxu0 %v78
  %v223 = vpop.f32.mrb[0].mxu0
  %v224 = vadd.f32 0.0, %v223
  %v225 = vpop.f32.mrb[0].mxu0
  %226 = vmatprep.mubr.f32.mxu0 0.0
  %227 = vmatmul.mubr.f32.gmra.mrb[0].mxu0 %v81
  %v228 = vpop.f32.mrb[0].mxu0
  %v229 = vadd.f32 0.0, %v228
  %v230 = vpop.f32.mrb[0].mxu0
  %231 = vdwg.mxu0
  %v232 = vld [vmem:[%s2] sm:$0x1]
  %v234 = vlaneseq
  %v235 = vshrl.u32 %v234, 7
  %v236 = vsub.s32 0, %v235
  %v237 = vrot.slane %v232, %v236
  %v239 = vmul.f32 %v154, %v237
  %v240 = vmul.f32 %v159, %v237
  %v241 = vmul.f32 %v164, %v237
  %v242 = vmul.f32 %v169, %v237
  %v243 = vmul.f32 %v174, %v237
  %v244 = vmul.f32 %v179, %v237
  %v245 = vmul.f32 %v184, %v237
  %v246 = vmul.f32 %v189, %v237
  %v247 = vmul.f32 %v194, %v237
  %v248 = vmul.f32 %v199, %v237
  %v249 = vmul.f32 %v204, %v237
  %v250 = vmul.f32 %v209, %v237
  %v251 = vmul.f32 %v214, %v237
  %v252 = vmul.f32 %v219, %v237
  %v253 = vmul.f32 %v224, %v237
  %v254 = vmul.f32 %v229, %v237
  %v255 = vld [vmem:[%s3] sm:$0x1]
  %v257 = vlaneseq
  %v258 = vshrl.u32 %v257, 7
  %v259 = vsub.s32 0, %v258
  %v260 = vrot.slane %v255, %v259
  %v262 = vadd.f32 %v239, %v260
  %v263 = vadd.f32 %v240, %v260
  %v264 = vadd.f32 %v241, %v260
  %v265 = vadd.f32 %v242, %v260
  %v266 = vadd.f32 %v243, %v260
  %v267 = vadd.f32 %v244, %v260
  %v268 = vadd.f32 %v245, %v260
  %v269 = vadd.f32 %v246, %v260
  %v270 = vadd.f32 %v247, %v260
  %v271 = vadd.f32 %v248, %v260
  %v272 = vadd.f32 %v249, %v260
  %v273 = vadd.f32 %v250, %v260
  %v274 = vadd.f32 %v251, %v260
  %v275 = vadd.f32 %v252, %v260
  %v276 = vadd.f32 %v253, %v260
  %v277 = vadd.f32 %v254, %v260
  %vm278 = vcmask 64512
  %279 = vst.msk [vmem:[%s4] sm:$0xff] %vm278, %v262
  %280 = vst.msk [vmem:[%s4 + $0x8] sm:$0xff] %vm278, %v263
  %281 = vst.msk [vmem:[%s4 + $0x10] sm:$0xff] %vm278, %v264
  %282 = vst.msk [vmem:[%s4 + $0x18] sm:$0xff] %vm278, %v265
  %283 = vst.msk [vmem:[%s4 + $0x20] sm:$0xff] %vm278, %v266
  %284 = vst.msk [vmem:[%s4 + $0x28] sm:$0xff] %vm278, %v267
  %285 = vst.msk [vmem:[%s4 + $0x30] sm:$0xff] %vm278, %v268
  %286 = vst.msk [vmem:[%s4 + $0x38] sm:$0xff] %vm278, %v269
  %287 = vst.msk [vmem:[%s4 + $0x40] sm:$0xff] %vm278, %v270
  %288 = vst.msk [vmem:[%s4 + $0x48] sm:$0xff] %vm278, %v271
  %289 = vst.msk [vmem:[%s4 + $0x50] sm:$0xff] %vm278, %v272
  %290 = vst.msk [vmem:[%s4 + $0x58] sm:$0xff] %vm278, %v273
  %291 = vst.msk [vmem:[%s4 + $0x60] sm:$0xff] %vm278, %v274
  %292 = vst.msk [vmem:[%s4 + $0x68] sm:$0xff] %vm278, %v275
  %293 = vst.msk [vmem:[%s4 + $0x70] sm:$0xff] %vm278, %v276
  %294 = vst.msk [vmem:[%s4 + $0x78] sm:$0xff] %vm278, %v277
  // Predicated region
  $region18: #{tpu_custom_call.1} parent=0 // pred_check
    _
  $region19: #{tpu_custom_call.1} parent=0 // pred_check_branch
    %296 = sbr.rel (0) target = $region21
  $region20: #{tpu_custom_call.1} parent=0 // pred_region
    _
  $region21: #{tpu_custom_call.1} parent=0 // pred_fallthru
    _
  // Predicated region
  $region22: #{tpu_custom_call.1} parent=0 // pred_check
    _
  $region23: #{tpu_custom_call.1} parent=0 // pred_check_branch
    %298 = sbr.rel (0) target = $region25
  $region24: #{tpu_custom_call.1} parent=0 // pred_region
    _
  $region25: #{tpu_custom_call.1} parent=0 // pred_fallthru
    _

</llo_original>
